<compile_context>
chip_gen: v7x
topology: tpu7x:2x2x1
jax: 0.10.0
libtpu: 0.0.40
codegen_flags: <defaults>
</compile_context>

<pallas_src>
import functools

import jax
import jax.numpy as jnp
from jax.experimental import pallas as pl
from jax.experimental.pallas import tpu as pltpu

# Logical dims of the PyTorch module.
D_IN, D_H1, D_H2, D_H3, D_OUT = 20, 128, 256, 128, 2
# Lane-padded dims (multiples of 128 -> unmasked loads/stores, clean MXU K/N).
D_IN_PAD, D_OUT_PAD = 128, 128
# Batch tile: >= MXU rows on every generation; 128-256 keeps v5e VMEM happy.
TB = 256


def mlp_kernel(x_ref, w1_ref, b1_ref, w2_ref, b2_ref,
               w3_ref, b3_ref, w4_ref, b4_ref, o_ref):
    # fc1 + relu  (bf16 operands, f32 MXU accumulation)
    h = jnp.dot(x_ref[...], w1_ref[...], preferred_element_type=jnp.float32)
    h = jnp.maximum(h + b1_ref[...], 0.0)
    # dropout(p=0.2) -> identity (eval-mode semantics)
    # fc2 + relu
    h = jnp.dot(h.astype(jnp.bfloat16), w2_ref[...],
                preferred_element_type=jnp.float32)
    h = jnp.maximum(h + b2_ref[...], 0.0)
    # dropout(p=0.2) -> identity (eval-mode semantics)
    # fc3 + relu
    h = jnp.dot(h.astype(jnp.bfloat16), w3_ref[...],
                preferred_element_type=jnp.float32)
    h = jnp.maximum(h + b3_ref[...], 0.0)
    # fc4 (output features zero-padded 2 -> 128 for a lane-dense store)
    out = jnp.dot(h.astype(jnp.bfloat16), w4_ref[...],
                  preferred_element_type=jnp.float32)
    o_ref[...] = (out + b4_ref[...]).astype(o_ref.dtype)


def _pad_params(params):
    """Zero-pad to lane-friendly shapes; cast matmul operands to bf16."""
    w1 = jnp.zeros((D_IN_PAD, D_H1), jnp.float32).at[:D_IN, :].set(params["w1"])
    w4 = jnp.zeros((D_H3, D_OUT_PAD), jnp.float32).at[:, :D_OUT].set(params["w4"])
    b4 = jnp.zeros((1, D_OUT_PAD), jnp.float32).at[:, :D_OUT].set(params["b4"])
    return dict(
        w1=w1.astype(jnp.bfloat16), b1=params["b1"],
        w2=params["w2"].astype(jnp.bfloat16), b2=params["b2"],
        w3=params["w3"].astype(jnp.bfloat16), b3=params["b3"],
        w4=w4.astype(jnp.bfloat16), b4=b4,
    )


@jax.jit
def mlp_forward(x, params):
    """x: (B, 20) float32. params: dict of (in, out) weights and (1, out) biases."""
    B = x.shape[0]
    B_pad = ((B + TB - 1) // TB) * TB
    n_tiles = B_pad // TB

    p = _pad_params(params)

    # Zero-pad batch to a TB multiple and features 20 -> 128; cast x to bf16.
    x_pad = jnp.zeros((B_pad, D_IN_PAD), jnp.float32)
    x_pad = x_pad.at[:B, :D_IN].set(x).astype(jnp.bfloat16)

    flops = 2 * B_pad * (D_IN_PAD * D_H1 + D_H1 * D_H2 + D_H2 * D_H3
                         + D_H3 * D_OUT_PAD)
    bytes_accessed = (x_pad.size * 2
                      + sum(int(v.size) * v.dtype.itemsize for v in p.values())
                      + B_pad * D_OUT_PAD * 4)

    const2 = lambda i: (0, 0)
    out_pad = pl.pallas_call(
        mlp_kernel,
        out_shape=jax.ShapeDtypeStruct((B_pad, D_OUT_PAD), jnp.float32),
        grid=(n_tiles,),
        in_specs=[
            pl.BlockSpec((TB, D_IN_PAD), lambda i: (i, 0)),       # x: batch-tiled
            pl.BlockSpec((D_IN_PAD, D_H1), const2),               # weights/biases:
            pl.BlockSpec((1, D_H1), const2),                      # VMEM-resident
            pl.BlockSpec((D_H1, D_H2), const2),
            pl.BlockSpec((1, D_H2), const2),
            pl.BlockSpec((D_H2, D_H3), const2),
            pl.BlockSpec((1, D_H3), const2),
            pl.BlockSpec((D_H3, D_OUT_PAD), const2),
            pl.BlockSpec((1, D_OUT_PAD), const2),
        ],
        out_specs=pl.BlockSpec((TB, D_OUT_PAD), lambda i: (i, 0)),
        compiler_params=pltpu.CompilerParams(
            dimension_semantics=("parallel",)),
        cost_estimate=pl.CostEstimate(
            flops=flops, transcendentals=0, bytes_accessed=bytes_accessed),
    )(x_pad, p["w1"], p["b1"], p["w2"], p["b2"],
      p["w3"], p["b3"], p["w4"], p["b4"])

    return out_pad[:B, :D_OUT]


def init_params(key):
    """Deterministic init matching nn.Linear shapes (stored transposed, f32)."""
    dims = [(D_IN, D_H1), (D_H1, D_H2), (D_H2, D_H3), (D_H3, D_OUT)]
    params = {}
    for i, (fan_in, fan_out) in enumerate(dims, start=1):
        key, kw, kb = jax.random.split(key, 3)
        bound = 1.0 / jnp.sqrt(fan_in)
        # PyTorch stores (out, in); we keep the transposed (in, out) layout.
        params[f"w{i}"] = jax.random.uniform(
            kw, (fan_in, fan_out), jnp.float32, minval=-bound, maxval=bound)
        params[f"b{i}"] = jax.random.uniform(
            kb, (1, fan_out), jnp.float32, minval=-bound, maxval=bound)
    return params


def ref_forward(x, params):
    h = jnp.maximum(x @ params["w1"] + params["b1"], 0.0)
    h = jnp.maximum(h @ params["w2"] + params["b2"], 0.0)
    h = jnp.maximum(h @ params["w3"] + params["b3"], 0.0)
    return h @ params["w4"] + params["b4"]


if __name__ == "__main__":
    key = jax.random.PRNGKey(0)
    key, kx = jax.random.split(key)
    params = init_params(key)

    # batch=8: single (padded) tile; batch=600: multi-tile grid (pads to 768).
    for batch in (8, 600):
        kx, kb = jax.random.split(kx)
        x = jax.random.normal(kb, (batch, D_IN), jnp.float32)

        out = jax.block_until_ready(mlp_forward(x, params))
        ref = ref_forward(x, params)

        assert out.shape == (batch, D_OUT)
        # bf16 matmul operands with f32 accumulation -> ~1e-2 level tolerance.
        assert jnp.allclose(out, ref, atol=3e-2, rtol=3e-2), (
            "max abs err", float(jnp.max(jnp.abs(out - ref))))

    print("KERNEL_OK")
</pallas_src>

<mosaic_0001>
module attributes {stable_mosaic.version = 11 : i64} {
  func.func @mlp_kernel(%arg0: i32, %arg1: memref<256x128xbf16, #tpu.memory_space<vmem>>, %arg2: memref<128x128xbf16, #tpu.memory_space<vmem>>, %arg3: memref<1x128xf32, #tpu.memory_space<vmem>>, %arg4: memref<128x256xbf16, #tpu.memory_space<vmem>>, %arg5: memref<1x256xf32, #tpu.memory_space<vmem>>, %arg6: memref<256x128xbf16, #tpu.memory_space<vmem>>, %arg7: memref<1x128xf32, #tpu.memory_space<vmem>>, %arg8: memref<128x128xbf16, #tpu.memory_space<vmem>>, %arg9: memref<1x128xf32, #tpu.memory_space<vmem>>, %arg10: memref<256x128xf32, #tpu.memory_space<vmem>>) attributes {dimension_semantics = [#tpu.dimension_semantics<parallel>], iteration_bounds = array<i64: 1>, scalar_prefetch = 0 : i64, scratch_operands = 0 : i64, tpu.core_type = #tpu.core_type<tc>, window_params = [{transform_indices = @transform_0, window_bounds = array<i64: 256, 128>}, {pipeline_mode = #tpu.pipeline_mode<synchronous>, transform_indices = @transform_1, window_bounds = array<i64: 128, 128>}, {pipeline_mode = #tpu.pipeline_mode<synchronous>, transform_indices = @transform_2, window_bounds = array<i64: 1, 128>}, {pipeline_mode = #tpu.pipeline_mode<synchronous>, transform_indices = @transform_3, window_bounds = array<i64: 128, 256>}, {pipeline_mode = #tpu.pipeline_mode<synchronous>, transform_indices = @transform_4, window_bounds = array<i64: 1, 256>}, {pipeline_mode = #tpu.pipeline_mode<synchronous>, transform_indices = @transform_5, window_bounds = array<i64: 256, 128>}, {pipeline_mode = #tpu.pipeline_mode<synchronous>, transform_indices = @transform_6, window_bounds = array<i64: 1, 128>}, {pipeline_mode = #tpu.pipeline_mode<synchronous>, transform_indices = @transform_7, window_bounds = array<i64: 128, 128>}, {pipeline_mode = #tpu.pipeline_mode<synchronous>, transform_indices = @transform_8, window_bounds = array<i64: 1, 128>}, {transform_indices = @transform_9, window_bounds = array<i64: 256, 128>}]} {
    %c0 = arith.constant 0 : index
    %c0_0 = arith.constant 0 : index
    %0 = vector.load %arg1[%c0, %c0_0] : memref<256x128xbf16, #tpu.memory_space<vmem>>, vector<256x128xbf16>
    %c0_1 = arith.constant 0 : index
    %c0_2 = arith.constant 0 : index
    %1 = vector.load %arg2[%c0_1, %c0_2] : memref<128x128xbf16, #tpu.memory_space<vmem>>, vector<128x128xbf16>
    %cst = arith.constant dense<0.000000e+00> : vector<256x128xf32>
    %2 = tpu.matmul %0, %1, %cst {dimension_numbers = #tpu.dot_dimension_numbers<[1], [0], [0], [1], [0, 0, 1, 1], [], []>} : vector<256x128xbf16>, vector<128x128xbf16>, vector<256x128xf32> -> vector<256x128xf32>
    %c0_3 = arith.constant 0 : index
    %c0_4 = arith.constant 0 : index
    %3 = vector.load %arg3[%c0_3, %c0_4] : memref<1x128xf32, #tpu.memory_space<vmem>>, vector<1x128xf32>
    %4 = vector.broadcast %3 : vector<1x128xf32> to vector<256x128xf32>
    %5 = arith.addf %2, %4 : vector<256x128xf32>
    %cst_5 = arith.constant 0.000000e+00 : f32
    %6 = vector.broadcast %cst_5 : f32 to vector<256x128xf32>
    %7 = arith.maximumf %5, %6 : vector<256x128xf32>
    %8 = arith.truncf %7 : vector<256x128xf32> to vector<256x128xbf16>
    %c0_6 = arith.constant 0 : index
    %c0_7 = arith.constant 0 : index
    %9 = vector.load %arg4[%c0_6, %c0_7] : memref<128x256xbf16, #tpu.memory_space<vmem>>, vector<128x256xbf16>
    %cst_8 = arith.constant dense<0.000000e+00> : vector<256x256xf32>
    %10 = tpu.matmul %8, %9, %cst_8 {dimension_numbers = #tpu.dot_dimension_numbers<[1], [0], [0], [1], [0, 0, 1, 1], [], []>} : vector<256x128xbf16>, vector<128x256xbf16>, vector<256x256xf32> -> vector<256x256xf32>
    %c0_9 = arith.constant 0 : index
    %c0_10 = arith.constant 0 : index
    %11 = vector.load %arg5[%c0_9, %c0_10] : memref<1x256xf32, #tpu.memory_space<vmem>>, vector<1x256xf32>
    %12 = vector.broadcast %11 : vector<1x256xf32> to vector<256x256xf32>
    %13 = arith.addf %10, %12 : vector<256x256xf32>
    %cst_11 = arith.constant 0.000000e+00 : f32
    %14 = vector.broadcast %cst_11 : f32 to vector<256x256xf32>
    %15 = arith.maximumf %13, %14 : vector<256x256xf32>
    %16 = arith.truncf %15 : vector<256x256xf32> to vector<256x256xbf16>
    %c0_12 = arith.constant 0 : index
    %c0_13 = arith.constant 0 : index
    %17 = vector.load %arg6[%c0_12, %c0_13] : memref<256x128xbf16, #tpu.memory_space<vmem>>, vector<256x128xbf16>
    %cst_14 = arith.constant dense<0.000000e+00> : vector<256x128xf32>
    %18 = tpu.matmul %16, %17, %cst_14 {dimension_numbers = #tpu.dot_dimension_numbers<[1], [0], [0], [1], [0, 0, 1, 1], [], []>} : vector<256x256xbf16>, vector<256x128xbf16>, vector<256x128xf32> -> vector<256x128xf32>
    %c0_15 = arith.constant 0 : index
    %c0_16 = arith.constant 0 : index
    %19 = vector.load %arg7[%c0_15, %c0_16] : memref<1x128xf32, #tpu.memory_space<vmem>>, vector<1x128xf32>
    %20 = vector.broadcast %19 : vector<1x128xf32> to vector<256x128xf32>
    %21 = arith.addf %18, %20 : vector<256x128xf32>
    %cst_17 = arith.constant 0.000000e+00 : f32
    %22 = vector.broadcast %cst_17 : f32 to vector<256x128xf32>
    %23 = arith.maximumf %21, %22 : vector<256x128xf32>
    %24 = arith.truncf %23 : vector<256x128xf32> to vector<256x128xbf16>
    %c0_18 = arith.constant 0 : index
    %c0_19 = arith.constant 0 : index
    %25 = vector.load %arg8[%c0_18, %c0_19] : memref<128x128xbf16, #tpu.memory_space<vmem>>, vector<128x128xbf16>
    %cst_20 = arith.constant dense<0.000000e+00> : vector<256x128xf32>
    %26 = tpu.matmul %24, %25, %cst_20 {dimension_numbers = #tpu.dot_dimension_numbers<[1], [0], [0], [1], [0, 0, 1, 1], [], []>} : vector<256x128xbf16>, vector<128x128xbf16>, vector<256x128xf32> -> vector<256x128xf32>
    %c0_21 = arith.constant 0 : index
    %c0_22 = arith.constant 0 : index
    %27 = vector.load %arg9[%c0_21, %c0_22] : memref<1x128xf32, #tpu.memory_space<vmem>>, vector<1x128xf32>
    %28 = vector.broadcast %27 : vector<1x128xf32> to vector<256x128xf32>
    %29 = arith.addf %26, %28 : vector<256x128xf32>
    %c0_23 = arith.constant 0 : index
    %c0_24 = arith.constant 0 : index
    %30 = vector.load %arg10[%c0_23, %c0_24] : memref<256x128xf32, #tpu.memory_space<vmem>>, vector<256x128xf32>
    tpu.vector_store %arg10[%c0_23, %c0_24], %29 {strides = array<i32>} : memref<256x128xf32, #tpu.memory_space<vmem>>, vector<256x128xf32>,
    return
  }
  func.func @transform_0(%arg0: i32) -> (i32, i32) {
    %c0_i32 = arith.constant 0 : i32
    %c0_i32_0 = arith.constant 0 : i32
    return %arg0, %c0_i32 : i32, i32
  }
  func.func @transform_1(%arg0: i32) -> (i32, i32) {
    %c0_i32 = arith.constant 0 : i32
    %c0_i32_0 = arith.constant 0 : i32
    %c0_i32_1 = arith.constant 0 : i32
    return %c0_i32, %c0_i32_0 : i32, i32
  }
  func.func @transform_2(%arg0: i32) -> (i32, i32) {
    %c0_i32 = arith.constant 0 : i32
    %c0_i32_0 = arith.constant 0 : i32
    %c0_i32_1 = arith.constant 0 : i32
    return %c0_i32, %c0_i32_0 : i32, i32
  }
  func.func @transform_3(%arg0: i32) -> (i32, i32) {
    %c0_i32 = arith.constant 0 : i32
    %c0_i32_0 = arith.constant 0 : i32
    %c0_i32_1 = arith.constant 0 : i32
    return %c0_i32, %c0_i32_0 : i32, i32
  }
  func.func @transform_4(%arg0: i32) -> (i32, i32) {
    %c0_i32 = arith.constant 0 : i32
    %c0_i32_0 = arith.constant 0 : i32
    %c0_i32_1 = arith.constant 0 : i32
    return %c0_i32, %c0_i32_0 : i32, i32
  }
  func.func @transform_5(%arg0: i32) -> (i32, i32) {
    %c0_i32 = arith.constant 0 : i32
    %c0_i32_0 = arith.constant 0 : i32
    %c0_i32_1 = arith.constant 0 : i32
    return %c0_i32, %c0_i32_0 : i32, i32
  }
  func.func @transform_6(%arg0: i32) -> (i32, i32) {
    %c0_i32 = arith.constant 0 : i32
    %c0_i32_0 = arith.constant 0 : i32
    %c0_i32_1 = arith.constant 0 : i32
    return %c0_i32, %c0_i32_0 : i32, i32
  }
  func.func @transform_7(%arg0: i32) -> (i32, i32) {
    %c0_i32 = arith.constant 0 : i32
    %c0_i32_0 = arith.constant 0 : i32
    %c0_i32_1 = arith.constant 0 : i32
    return %c0_i32, %c0_i32_0 : i32, i32
  }
  func.func @transform_8(%arg0: i32) -> (i32, i32) {
    %c0_i32 = arith.constant 0 : i32
    %c0_i32_0 = arith.constant 0 : i32
    %c0_i32_1 = arith.constant 0 : i32
    return %c0_i32, %c0_i32_0 : i32, i32
  }
  func.func @transform_9(%arg0: i32) -> (i32, i32) {
    %c0_i32 = arith.constant 0 : i32
    %c0_i32_0 = arith.constant 0 : i32
    return %arg0, %c0_i32 : i32, i32
  }
}

</mosaic_0001>

<llo_original>
// kernel: mlp_forward.1
$region0: #{mlp_forward.1}
  #allocation0 [shape = 'u32[]', space=smem, size = 0x4, offset = 0x4, fixed_abs, tag = 'smem constant byte address 0x4 - core index']
  #allocation1 [shape = 'u32[144,128]{1,0:T(1,128)}', space=vmem, size = 0x12000, scoped, tag = 'internal scratch']
  %s0 = inlined_call_operand.vmem [shape: bf16[256,128], index: 0, kind: input, shape index: {}]
  %s1 = inlined_call_operand.vmem [shape: bf16[128,128], index: 1, kind: input, shape index: {}]
  %s2 = inlined_call_operand.vmem [shape: f32[1,128], index: 2, kind: input, shape index: {}]
  %s3 = inlined_call_operand.vmem [shape: bf16[128,256], index: 3, kind: input, shape index: {}]
  %s4 = inlined_call_operand.vmem [shape: f32[1,256], index: 4, kind: input, shape index: {}]
  %s5 = inlined_call_operand.vmem [shape: bf16[256,128], index: 5, kind: input, shape index: {}]
  %s6 = inlined_call_operand.vmem [shape: f32[1,128], index: 6, kind: input, shape index: {}]
  %s7 = inlined_call_operand.vmem [shape: bf16[128,128], index: 7, kind: input, shape index: {}]
  %s8 = inlined_call_operand.vmem [shape: f32[1,128], index: 8, kind: input, shape index: {}]
  %s9 = inlined_call_operand.vmem [shape: f32[256,128], index: 9, kind: output, shape index: {}]
  %s10 = sld [smem:[#allocation0]]
  $region46: #{mlp_forward.1} parent=0
    _
  %s12 = ssub.s32 1, %s10
  %s13 = scalar_select 0, %s12, %s10
  // Predicated region
  $region2: #{mlp_forward.1} parent=0 // pred_check
    _
  $region3: #{mlp_forward.1} parent=0 // pred_check_branch
    %15 = sbr.rel (0) target = $region5
  $region4: #{mlp_forward.1} parent=0 // pred_region
    _
  $region5: #{mlp_forward.1} parent=0 // pred_fallthru
    _
  // Predicated region
  $region6: #{mlp_forward.1} parent=0 // pred_check
    _
  $region7: #{mlp_forward.1} parent=0 // pred_check_branch
    %17 = sbr.rel (0) target = $region9
  $region8: #{mlp_forward.1} parent=0 // pred_region
    _
  $region9: #{mlp_forward.1} parent=0 // pred_fallthru
    _
  // Predicated region
  $region10: #{mlp_forward.1} parent=0 // pred_check
    _
  $region11: #{mlp_forward.1} parent=0 // pred_check_branch
    %19 = sbr.rel (0) target = $region13
  $region12: #{mlp_forward.1} parent=0 // pred_region
    _
  $region13: #{mlp_forward.1} parent=0 // pred_fallthru
    _
  // Predicated region
  $region14: #{mlp_forward.1} parent=0 // pred_check
    _
  $region15: #{mlp_forward.1} parent=0 // pred_check_branch
    %21 = sbr.rel (0) target = $region17
  $region16: #{mlp_forward.1} parent=0 // pred_region
    _
  $region17: #{mlp_forward.1} parent=0 // pred_fallthru
    _
  // Predicated region
  $region18: #{mlp_forward.1} parent=0 // pred_check
    _
  $region19: #{mlp_forward.1} parent=0 // pred_check_branch
    %23 = sbr.rel (0) target = $region21
  $region20: #{mlp_forward.1} parent=0 // pred_region
    _
  $region21: #{mlp_forward.1} parent=0 // pred_fallthru
    _
  // Predicated region
  $region22: #{mlp_forward.1} parent=0 // pred_check
    _
  $region23: #{mlp_forward.1} parent=0 // pred_check_branch
    %25 = sbr.rel (0) target = $region25
  $region24: #{mlp_forward.1} parent=0 // pred_region
    _
  $region25: #{mlp_forward.1} parent=0 // pred_fallthru
    _
  // Predicated region
  $region26: #{mlp_forward.1} parent=0 // pred_check
    _
  $region27: #{mlp_forward.1} parent=0 // pred_check_branch
    %27 = sbr.rel (0) target = $region29
  $region28: #{mlp_forward.1} parent=0 // pred_region
    _
  $region29: #{mlp_forward.1} parent=0 // pred_fallthru
    _
  // Predicated region
  $region30: #{mlp_forward.1} parent=0 // pred_check
    _
  $region31: #{mlp_forward.1} parent=0 // pred_check_branch
    %29 = sbr.rel (0) target = $region33
  $region32: #{mlp_forward.1} parent=0 // pred_region
    _
  $region33: #{mlp_forward.1} parent=0 // pred_fallthru
    _
  // Predicated region
  $region34: #{mlp_forward.1} parent=0 // pred_check
    _
  $region35: #{mlp_forward.1} parent=0 // pred_check_branch
    %31 = sbr.rel (0) target = $region37
  $region36: #{mlp_forward.1} parent=0 // pred_region
    _
  $region37: #{mlp_forward.1} parent=0 // pred_fallthru
    _
  %v33 = vld [vmem:[%s0] sm:$0xf]
  %v34 = vld [vmem:[%s0 + $0x4] sm:$0xf]
  %v35 = vld [vmem:[%s0 + $0x8] sm:$0xf]
  %v36 = vld [vmem:[%s0 + $0xc] sm:$0xf]
  %v37 = vld [vmem:[%s0 + $0x10] sm:$0xf]
  %v38 = vld [vmem:[%s0 + $0x14] sm:$0xf]
  %v39 = vld [vmem:[%s0 + $0x18] sm:$0xf]
  %v40 = vld [vmem:[%s0 + $0x1c] sm:$0xf]
  %v41 = vld [vmem:[%s0 + $0x20] sm:$0xf]
  %v42 = vld [vmem:[%s0 + $0x24] sm:$0xf]
  %v43 = vld [vmem:[%s0 + $0x28] sm:$0xf]
  %v44 = vld [vmem:[%s0 + $0x2c] sm:$0xf]
  %v45 = vld [vmem:[%s0 + $0x30] sm:$0xf]
  %v46 = vld [vmem:[%s0 + $0x34] sm:$0xf]
  %v47 = vld [vmem:[%s0 + $0x38] sm:$0xf]
  %v48 = vld [vmem:[%s0 + $0x3c] sm:$0xf]
  %v49 = vld [vmem:[%s0 + $0x40] sm:$0xf]
  %v50 = vld [vmem:[%s0 + $0x44] sm:$0xf]
  %v51 = vld [vmem:[%s0 + $0x48] sm:$0xf]
  %v52 = vld [vmem:[%s0 + $0x4c] sm:$0xf]
  %v53 = vld [vmem:[%s0 + $0x50] sm:$0xf]
  %v54 = vld [vmem:[%s0 + $0x54] sm:$0xf]
  %v55 = vld [vmem:[%s0 + $0x58] sm:$0xf]
  %v56 = vld [vmem:[%s0 + $0x5c] sm:$0xf]
  %v57 = vld [vmem:[%s0 + $0x60] sm:$0xf]
  %v58 = vld [vmem:[%s0 + $0x64] sm:$0xf]
  %v59 = vld [vmem:[%s0 + $0x68] sm:$0xf]
  %v60 = vld [vmem:[%s0 + $0x6c] sm:$0xf]
  %v61 = vld [vmem:[%s0 + $0x70] sm:$0xf]
  %v62 = vld [vmem:[%s0 + $0x74] sm:$0xf]
  %v63 = vld [vmem:[%s0 + $0x78] sm:$0xf]
  %v64 = vld [vmem:[%s0 + $0x7c] sm:$0xf]
  %v65 = vld [vmem:[%s1] sm:$0xf]
  %v66 = vld [vmem:[%s1 + $0x4] sm:$0xf]
  %v67 = vld [vmem:[%s1 + $0x8] sm:$0xf]
  %v68 = vld [vmem:[%s1 + $0xc] sm:$0xf]
  %v69 = vld [vmem:[%s1 + $0x10] sm:$0xf]
  %v70 = vld [vmem:[%s1 + $0x14] sm:$0xf]
  %v71 = vld [vmem:[%s1 + $0x18] sm:$0xf]
  %v72 = vld [vmem:[%s1 + $0x1c] sm:$0xf]
  %v73 = vld [vmem:[%s1 + $0x20] sm:$0xf]
  %v74 = vld [vmem:[%s1 + $0x24] sm:$0xf]
  %v75 = vld [vmem:[%s1 + $0x28] sm:$0xf]
  %v76 = vld [vmem:[%s1 + $0x2c] sm:$0xf]
  %v77 = vld [vmem:[%s1 + $0x30] sm:$0xf]
  %v78 = vld [vmem:[%s1 + $0x34] sm:$0xf]
  %v79 = vld [vmem:[%s1 + $0x38] sm:$0xf]
  %v80 = vld [vmem:[%s1 + $0x3c] sm:$0xf]
  %v81 = vld [vmem:[%s2] sm:$0x1]
  %v83 = vlaneseq
  %v84 = vshrl.u32 %v83, 7
  %v85 = vsub.s32 0, %v84
  %v86 = vrot.slane %v81, %v85
  %v120 = vunpack.c.l.b16 %v33
  %v121 = vunpack.c.l.b16 %v34
  %v122 = vunpack.c.l.b16 %v35
  %v123 = vunpack.c.l.b16 %v36
  %v124 = vunpack.c.l.b16 %v37
  %v125 = vunpack.c.l.b16 %v38
  %v126 = vunpack.c.l.b16 %v39
  %v127 = vunpack.c.l.b16 %v40
  %v128 = vunpack.c.l.b16 %v41
  %v129 = vunpack.c.l.b16 %v42
  %v130 = vunpack.c.l.b16 %v43
  %v131 = vunpack.c.l.b16 %v44
  %v132 = vunpack.c.l.b16 %v45
  %v133 = vunpack.c.l.b16 %v46
  %v134 = vunpack.c.l.b16 %v47
  %v135 = vunpack.c.l.b16 %v48
  %v136 = vunpack.c.l.b16 %v49
  %v137 = vunpack.c.l.b16 %v50
  %v138 = vunpack.c.l.b16 %v51
  %v139 = vunpack.c.l.b16 %v52
  %v140 = vunpack.c.l.b16 %v53
  %v141 = vunpack.c.l.b16 %v54
  %v142 = vunpack.c.l.b16 %v55
  %v143 = vunpack.c.l.b16 %v56
  %v144 = vunpack.c.l.b16 %v57
  %v145 = vunpack.c.l.b16 %v58
  %v146 = vunpack.c.l.b16 %v59
  %v147 = vunpack.c.l.b16 %v60
  %v148 = vunpack.c.l.b16 %v61
  %v149 = vunpack.c.l.b16 %v62
  %v150 = vunpack.c.l.b16 %v63
  %v151 = vunpack.c.l.b16 %v64
  %v152 = vpack.c.b16 %v121, %v120
  %v153 = vpack.c.b16 %v123, %v122
  %v154 = vpack.c.b16 %v125, %v124
  %v155 = vpack.c.b16 %v127, %v126
  %v156 = vpack.c.b16 %v129, %v128
  %v157 = vpack.c.b16 %v131, %v130
  %v158 = vpack.c.b16 %v133, %v132
  %v159 = vpack.c.b16 %v135, %v134
  %v160 = vpack.c.b16 %v137, %v136
  %v161 = vpack.c.b16 %v139, %v138
  %v162 = vpack.c.b16 %v141, %v140
  %v163 = vpack.c.b16 %v143, %v142
  %v164 = vpack.c.b16 %v145, %v144
  %v165 = vpack.c.b16 %v147, %v146
  %v166 = vpack.c.b16 %v149, %v148
  %v167 = vpack.c.b16 %v151, %v150
  %v200 = vunpack.c.l.b16 %v65
  %v201 = vunpack.c.l.b16 %v66
  %v202 = vunpack.c.l.b16 %v67
  %v203 = vunpack.c.l.b16 %v68
  %v204 = vunpack.c.l.b16 %v69
  %v205 = vunpack.c.l.b16 %v70
  %v206 = vunpack.c.l.b16 %v71
  %v207 = vunpack.c.l.b16 %v72
  %v208 = vunpack.c.l.b16 %v73
  %v209 = vunpack.c.l.b16 %v74
  %v210 = vunpack.c.l.b16 %v75
  %v211 = vunpack.c.l.b16 %v76
  %v212 = vunpack.c.l.b16 %v77
  %v213 = vunpack.c.l.b16 %v78
  %v214 = vunpack.c.l.b16 %v79
  %v215 = vunpack.c.l.b16 %v80
  %v216 = vpack.c.b16 %v201, %v200
  %v217 = vpack.c.b16 %v203, %v202
  %v218 = vpack.c.b16 %v205, %v204
  %v219 = vpack.c.b16 %v207, %v206
  %v220 = vpack.c.b16 %v209, %v208
  %v221 = vpack.c.b16 %v211, %v210
  %v222 = vpack.c.b16 %v213, %v212
  %v223 = vpack.c.b16 %v215, %v214
  %232 = vmatprep.subr.bf16.mxu0 0
  %233 = vmatpush1.bf16.msra.mxu0 %v216
  %234 = vmatprep.subr.bf16.mxu0 0
  %235 = vmatpush1.bf16.msra.mxu0 %v217
  %236 = vmatprep.subr.bf16.mxu0 0
  %237 = vmatpush1.bf16.msra.mxu0 %v218
  %238 = vmatprep.subr.bf16.mxu0 0
  %239 = vmatpush1.bf16.msra.mxu0 %v219
  %240 = vmatprep.subr.bf16.mxu0 0
  %241 = vmatpush1.bf16.msra.mxu0 %v220
  %242 = vmatprep.subr.bf16.mxu0 0
  %243 = vmatpush1.bf16.msra.mxu0 %v221
  %244 = vmatprep.subr.bf16.mxu0 0
  %245 = vmatpush1.bf16.msra.mxu0 %v222
  %246 = vmatprep.subr.bf16.mxu0 0
  %247 = vmatpush1.bf16.msra.mxu0 %v223
  %248 = vmatprep.subr.bf16.mxu0 0
  %249 = vmatpush1.bf16.msra.mxu0 0
  %250 = vmatprep.subr.bf16.mxu0 0
  %251 = vmatpush1.bf16.msra.mxu0 0
  %252 = vmatprep.subr.bf16.mxu0 0
  %253 = vmatpush1.bf16.msra.mxu0 0
  %254 = vmatprep.subr.bf16.mxu0 0
  %255 = vmatpush1.bf16.msra.mxu0 0
  %256 = vmatprep.subr.bf16.mxu0 0
  %257 = vmatpush1.bf16.msra.mxu0 0
  %258 = vmatprep.subr.bf16.mxu0 0
  %259 = vmatpush1.bf16.msra.mxu0 0
  %260 = vmatprep.subr.bf16.mxu0 0
  %261 = vmatpush1.bf16.msra.mxu0 0
  %262 = vmatprep.subr.bf16.mxu0 0
  %263 = vmatpush1.bf16.msra.mxu0 0
  %264 = vmatprep.mubr.bf16.mxu0 0
  %265 = vmatmul.mubr.bf16.gmra.mrb[0].mxu0 %v152
  %v266 = vpop.f32.mrb[0].mxu0
  %v267 = vadd.f32 %v86, %v266
  %v268 = vpop.f32.mrb[0].mxu0
  %v269 = vpop.f32.mrb[0].mxu0
  %v270 = vadd.f32 %v86, %v269
  %v271 = vpop.f32.mrb[0].mxu0
  %272 = vmatprep.mubr.bf16.mxu0 0
  %273 = vmatmul.mubr.bf16.gmra.mrb[0].mxu0 %v153
  %v274 = vpop.f32.mrb[0].mxu0
  %v275 = vadd.f32 %v86, %v274
  %v276 = vpop.f32.mrb[0].mxu0
  %v277 = vpop.f32.mrb[0].mxu0
  %v278 = vadd.f32 %v86, %v277
  %v279 = vpop.f32.mrb[0].mxu0
  %280 = vmatprep.mubr.bf16.mxu0 0
  %281 = vmatmul.mubr.bf16.gmra.mrb[0].mxu0 %v154
  %v282 = vpop.f32.mrb[0].mxu0
  %v283 = vadd.f32 %v86, %v282
  %v284 = vpop.f32.mrb[0].mxu0
  %v285 = vpop.f32.mrb[0].mxu0
  %v286 = vadd.f32 %v86, %v285
  %v287 = vpop.f32.mrb[0].mxu0
  %288 = vmatprep.mubr.bf16.mxu0 0
  %289 = vmatmul.mubr.bf16.gmra.mrb[0].mxu0 %v155
  %v290 = vpop.f32.mrb[0].mxu0
  %v291 = vadd.f32 %v86, %v290
  %v292 = vpop.f32.mrb[0].mxu0
  %v293 = vpop.f32.mrb[0].mxu0
  %v294 = vadd.f32 %v86, %v293
  %v295 = vpop.f32.mrb[0].mxu0
  %296 = vmatprep.mubr.bf16.mxu0 0
  %297 = vmatmul.mubr.bf16.gmra.mrb[0].mxu0 %v156
  %v298 = vpop.f32.mrb[0].mxu0
  %v299 = vadd.f32 %v86, %v298
  %v300 = vpop.f32.mrb[0].mxu0
  %v301 = vpop.f32.mrb[0].mxu0
  %v302 = vadd.f32 %v86, %v301
  %v303 = vpop.f32.mrb[0].mxu0
  %304 = vmatprep.mubr.bf16.mxu0 0
  %305 = vmatmul.mubr.bf16.gmra.mrb[0].mxu0 %v157
  %v306 = vpop.f32.mrb[0].mxu0
  %v307 = vadd.f32 %v86, %v306
  %v308 = vpop.f32.mrb[0].mxu0
  %v309 = vpop.f32.mrb[0].mxu0
  %v310 = vadd.f32 %v86, %v309
  %v311 = vpop.f32.mrb[0].mxu0
  %312 = vmatprep.mubr.bf16.mxu0 0
  %313 = vmatmul.mubr.bf16.gmra.mrb[0].mxu0 %v158
  %v314 = vpop.f32.mrb[0].mxu0
  %v315 = vadd.f32 %v86, %v314
  %v316 = vpop.f32.mrb[0].mxu0
  %v317 = vpop.f32.mrb[0].mxu0
  %v318 = vadd.f32 %v86, %v317
  %v319 = vpop.f32.mrb[0].mxu0
  %320 = vmatprep.mubr.bf16.mxu0 0
  %321 = vmatmul.mubr.bf16.gmra.mrb[0].mxu0 %v159
  %v322 = vpop.f32.mrb[0].mxu0
  %v323 = vadd.f32 %v86, %v322
  %v324 = vpop.f32.mrb[0].mxu0
  %v325 = vpop.f32.mrb[0].mxu0
  %v326 = vadd.f32 %v86, %v325
  %v327 = vpop.f32.mrb[0].mxu0
  %328 = vmatprep.mubr.bf16.mxu0 0
  %329 = vmatmul.mubr.bf16.gmra.mrb[0].mxu0 %v160
  %v330 = vpop.f32.mrb[0].mxu0
  %v331 = vadd.f32 %v86, %v330
  %v332 = vpop.f32.mrb[0].mxu0
  %v333 = vpop.f32.mrb[0].mxu0
  %v334 = vadd.f32 %v86, %v333
  %v335 = vpop.f32.mrb[0].mxu0
  %336 = vmatprep.mubr.bf16.mxu0 0
  %337 = vmatmul.mubr.bf16.gmra.mrb[0].mxu0 %v161
  %v338 = vpop.f32.mrb[0].mxu0
  %v339 = vadd.f32 %v86, %v338
  %v340 = vpop.f32.mrb[0].mxu0
  %v341 = vpop.f32.mrb[0].mxu0
  %v342 = vadd.f32 %v86, %v341
  %v343 = vpop.f32.mrb[0].mxu0
  %344 = vmatprep.mubr.bf16.mxu0 0
  %345 = vmatmul.mubr.bf16.gmra.mrb[0].mxu0 %v162
  %v346 = vpop.f32.mrb[0].mxu0
  %v347 = vadd.f32 %v86, %v346
  %v348 = vpop.f32.mrb[0].mxu0
  %v349 = vpop.f32.mrb[0].mxu0
  %v350 = vadd.f32 %v86, %v349
  %v351 = vpop.f32.mrb[0].mxu0
  %352 = vmatprep.mubr.bf16.mxu0 0
  %353 = vmatmul.mubr.bf16.gmra.mrb[0].mxu0 %v163
  %v354 = vpop.f32.mrb[0].mxu0
  %v355 = vadd.f32 %v86, %v354
  %v356 = vpop.f32.mrb[0].mxu0
  %v357 = vpop.f32.mrb[0].mxu0
  %v358 = vadd.f32 %v86, %v357
  %v359 = vpop.f32.mrb[0].mxu0
  %360 = vmatprep.mubr.bf16.mxu0 0
  %361 = vmatmul.mubr.bf16.gmra.mrb[0].mxu0 %v164
  %v362 = vpop.f32.mrb[0].mxu0
  %v363 = vadd.f32 %v86, %v362
  %v364 = vpop.f32.mrb[0].mxu0
  %v365 = vpop.f32.mrb[0].mxu0
  %v366 = vadd.f32 %v86, %v365
  %v367 = vpop.f32.mrb[0].mxu0
  %368 = vmatprep.mubr.bf16.mxu0 0
  %369 = vmatmul.mubr.bf16.gmra.mrb[0].mxu0 %v165
  %v370 = vpop.f32.mrb[0].mxu0
  %v371 = vadd.f32 %v86, %v370
  %v372 = vpop.f32.mrb[0].mxu0
  %v373 = vpop.f32.mrb[0].mxu0
  %v374 = vadd.f32 %v86, %v373
  %v375 = vpop.f32.mrb[0].mxu0
  %376 = vmatprep.mubr.bf16.mxu0 0
  %377 = vmatmul.mubr.bf16.gmra.mrb[0].mxu0 %v166
  %v378 = vpop.f32.mrb[0].mxu0
  %v379 = vadd.f32 %v86, %v378
  %v380 = vpop.f32.mrb[0].mxu0
  %v381 = vpop.f32.mrb[0].mxu0
  %v382 = vadd.f32 %v86, %v381
  %v383 = vpop.f32.mrb[0].mxu0
  %384 = vmatprep.mubr.bf16.mxu0 0
  %385 = vmatmul.mubr.bf16.gmra.mrb[0].mxu0 %v167
  %v386 = vpop.f32.mrb[0].mxu0
  %v387 = vadd.f32 %v86, %v386
  %v388 = vpop.f32.mrb[0].mxu0
  %v389 = vpop.f32.mrb[0].mxu0
  %v390 = vadd.f32 %v86, %v389
  %v391 = vpop.f32.mrb[0].mxu0
  %392 = vdwg.mxu0
  %v393 = vmax.f32 %v267, 0.0
  %v394 = vmax.f32 %v270, 0.0
  %v395 = vmax.f32 %v275, 0.0
  %v396 = vmax.f32 %v278, 0.0
  %v397 = vmax.f32 %v283, 0.0
  %v398 = vmax.f32 %v286, 0.0
  %v399 = vmax.f32 %v291, 0.0
  %v400 = vmax.f32 %v294, 0.0
  %v401 = vmax.f32 %v299, 0.0
  %v402 = vmax.f32 %v302, 0.0
  %v403 = vmax.f32 %v307, 0.0
  %v404 = vmax.f32 %v310, 0.0
  %v405 = vmax.f32 %v315, 0.0
  %v406 = vmax.f32 %v318, 0.0
  %v407 = vmax.f32 %v323, 0.0
  %v408 = vmax.f32 %v326, 0.0
  %v409 = vmax.f32 %v331, 0.0
  %v410 = vmax.f32 %v334, 0.0
  %v411 = vmax.f32 %v339, 0.0
  %v412 = vmax.f32 %v342, 0.0
  %v413 = vmax.f32 %v347, 0.0
  %v414 = vmax.f32 %v350, 0.0
  %v415 = vmax.f32 %v355, 0.0
  %v416 = vmax.f32 %v358, 0.0
  %v417 = vmax.f32 %v363, 0.0
  %v418 = vmax.f32 %v366, 0.0
  %v419 = vmax.f32 %v371, 0.0
  %v420 = vmax.f32 %v374, 0.0
  %v421 = vmax.f32 %v379, 0.0
  %v422 = vmax.f32 %v382, 0.0
  %v423 = vmax.f32 %v387, 0.0
  %v424 = vmax.f32 %v390, 0.0
  %v425 = vpack.c.bf16 %v394, %v393
  %v426 = vpack.c.bf16 %v396, %v395
  %v427 = vpack.c.bf16 %v398, %v397
  %v428 = vpack.c.bf16 %v400, %v399
  %v429 = vpack.c.bf16 %v402, %v401
  %v430 = vpack.c.bf16 %v404, %v403
  %v431 = vpack.c.bf16 %v406, %v405
  %v432 = vpack.c.bf16 %v408, %v407
  %v433 = vpack.c.bf16 %v410, %v409
  %v434 = vpack.c.bf16 %v412, %v411
  %v435 = vpack.c.bf16 %v414, %v413
  %v436 = vpack.c.bf16 %v416, %v415
  %v437 = vpack.c.bf16 %v418, %v417
  %v438 = vpack.c.bf16 %v420, %v419
  %v439 = vpack.c.bf16 %v422, %v421
  %v440 = vpack.c.bf16 %v424, %v423
  %v441 = vld [vmem:[%s3] sm:$0xff]
  %v442 = vld [vmem:[%s3 + $0x8] sm:$0xff]
  %v443 = vld [vmem:[%s3 + $0x10] sm:$0xff]
  %v444 = vld [vmem:[%s3 + $0x18] sm:$0xff]
  %v445 = vld [vmem:[%s3 + $0x20] sm:$0xff]
  %v446 = vld [vmem:[%s3 + $0x28] sm:$0xff]
  %v447 = vld [vmem:[%s3 + $0x30] sm:$0xff]
  %v448 = vld [vmem:[%s3 + $0x38] sm:$0xff]
  %v449 = vld [vmem:[%s3 + $0x40] sm:$0xff]
  %v450 = vld [vmem:[%s3 + $0x48] sm:$0xff]
  %v451 = vld [vmem:[%s3 + $0x50] sm:$0xff]
  %v452 = vld [vmem:[%s3 + $0x58] sm:$0xff]
  %v453 = vld [vmem:[%s3 + $0x60] sm:$0xff]
  %v454 = vld [vmem:[%s3 + $0x68] sm:$0xff]
  %v455 = vld [vmem:[%s3 + $0x70] sm:$0xff]
  %v456 = vld [vmem:[%s3 + $0x78] sm:$0xff]
  %v457 = vld [vmem:[%s4] sm:$0x3]
  %v459 = vlaneseq
  %v460 = vshrl.u32 %v459, 7
  %v461 = vsub.s32 0, %v460
  %v462 = vrot.slane %v457, %v461
  %v463 = vlaneseq
  %v464 = vshrl.u32 %v463, 7
  %v465 = vsub.s32 1, %v464
  %v466 = vrot.slane %v457, %v465
  %v485 = vunpack.c.l.b16 %v441
  %v486 = vunpack.c.h.b16 %v441
  %v487 = vunpack.c.l.b16 %v442
  %v488 = vunpack.c.h.b16 %v442
  %v489 = vunpack.c.l.b16 %v443
  %v490 = vunpack.c.h.b16 %v443
  %v491 = vunpack.c.l.b16 %v444
  %v492 = vunpack.c.h.b16 %v444
  %v493 = vunpack.c.l.b16 %v445
  %v494 = vunpack.c.h.b16 %v445
  %v495 = vunpack.c.l.b16 %v446
  %v496 = vunpack.c.h.b16 %v446
  %v497 = vunpack.c.l.b16 %v447
  %v498 = vunpack.c.h.b16 %v447
  %v499 = vunpack.c.l.b16 %v448
  %v500 = vunpack.c.h.b16 %v448
  %v501 = vunpack.c.l.b16 %v449
  %v502 = vunpack.c.h.b16 %v449
  %v503 = vunpack.c.l.b16 %v450
  %v504 = vunpack.c.h.b16 %v450
  %v505 = vunpack.c.l.b16 %v451
  %v506 = vunpack.c.h.b16 %v451
  %v507 = vunpack.c.l.b16 %v452
  %v508 = vunpack.c.h.b16 %v452
  %v509 = vunpack.c.l.b16 %v453
  %v510 = vunpack.c.h.b16 %v453
  %v511 = vunpack.c.l.b16 %v454
  %v512 = vunpack.c.h.b16 %v454
  %v513 = vunpack.c.l.b16 %v455
  %v514 = vunpack.c.h.b16 %v455
  %v515 = vunpack.c.l.b16 %v456
  %v516 = vunpack.c.h.b16 %v456
  %v517 = vpack.c.b16 %v487, %v485
  %v518 = vpack.c.b16 %v488, %v486
  %v519 = vpack.c.b16 %v491, %v489
  %v520 = vpack.c.b16 %v492, %v490
  %v521 = vpack.c.b16 %v495, %v493
  %v522 = vpack.c.b16 %v496, %v494
  %v523 = vpack.c.b16 %v499, %v497
  %v524 = vpack.c.b16 %v500, %v498
  %v525 = vpack.c.b16 %v503, %v501
  %v526 = vpack.c.b16 %v504, %v502
  %v527 = vpack.c.b16 %v507, %v505
  %v528 = vpack.c.b16 %v508, %v506
  %v529 = vpack.c.b16 %v511, %v509
  %v530 = vpack.c.b16 %v512, %v510
  %v531 = vpack.c.b16 %v515, %v513
  %v532 = vpack.c.b16 %v516, %v514
  %549 = vmatprep.subr.bf16.mxu0 %v518
  %550 = vmatpush1.bf16.msra.mxu0 %v517
  %551 = vmatprep.subr.bf16.mxu0 %v520
  %552 = vmatpush1.bf16.msra.mxu0 %v519
  %553 = vmatprep.subr.bf16.mxu0 %v522
  %554 = vmatpush1.bf16.msra.mxu0 %v521
  %555 = vmatprep.subr.bf16.mxu0 %v524
  %556 = vmatpush1.bf16.msra.mxu0 %v523
  %557 = vmatprep.subr.bf16.mxu0 %v526
  %558 = vmatpush1.bf16.msra.mxu0 %v525
  %559 = vmatprep.subr.bf16.mxu0 %v528
  %560 = vmatpush1.bf16.msra.mxu0 %v527
  %561 = vmatprep.subr.bf16.mxu0 %v530
  %562 = vmatpush1.bf16.msra.mxu0 %v529
  %563 = vmatprep.subr.bf16.mxu0 %v532
  %564 = vmatpush1.bf16.msra.mxu0 %v531
  %565 = vmatprep.subr.bf16.mxu0 0
  %566 = vmatpush1.bf16.msra.mxu0 0
  %567 = vmatprep.subr.bf16.mxu0 0
  %568 = vmatpush1.bf16.msra.mxu0 0
  %569 = vmatprep.subr.bf16.mxu0 0
  %570 = vmatpush1.bf16.msra.mxu0 0
  %571 = vmatprep.subr.bf16.mxu0 0
  %572 = vmatpush1.bf16.msra.mxu0 0
  %573 = vmatprep.subr.bf16.mxu0 0
  %574 = vmatpush1.bf16.msra.mxu0 0
  %575 = vmatprep.subr.bf16.mxu0 0
  %576 = vmatpush1.bf16.msra.mxu0 0
  %577 = vmatprep.subr.bf16.mxu0 0
  %578 = vmatpush1.bf16.msra.mxu0 0
  %579 = vmatprep.subr.bf16.mxu0 0
  %580 = vmatpush1.bf16.msra.mxu0 0
  %581 = vmatprep.mubr.bf16.mxu0 0
  %582 = vmatmul.mubr.bf16.gmra.mrb[0].mxu0 %v425
  %v583 = vpop.f32.mrb[0].mxu0
  %v584 = vadd.f32 %v462, %v583
  %v585 = vpop.f32.mrb[0].mxu0
  %v586 = vadd.f32 %v466, %v585
  %v587 = vpop.f32.mrb[0].mxu0
  %v588 = vadd.f32 %v462, %v587
  %v589 = vpop.f32.mrb[0].mxu0
  %v590 = vadd.f32 %v466, %v589
  %591 = vmatprep.mubr.bf16.mxu0 0
  %592 = vmatmul.mubr.bf16.gmra.mrb[0].mxu0 %v426
  %v593 = vpop.f32.mrb[0].mxu0
  %v594 = vadd.f32 %v462, %v593
  %v595 = vpop.f32.mrb[0].mxu0
  %v596 = vadd.f32 %v466, %v595
  %v597 = vpop.f32.mrb[0].mxu0
  %v598 = vadd.f32 %v462, %v597
  %v599 = vpop.f32.mrb[0].mxu0
  %v600 = vadd.f32 %v466, %v599
  %601 = vmatprep.mubr.bf16.mxu0 0
  %602 = vmatmul.mubr.bf16.gmra.mrb[0].mxu0 %v427
  %v603 = vpop.f32.mrb[0].mxu0
  %v604 = vadd.f32 %v462, %v603
  %v605 = vpop.f32.mrb[0].mxu0
  %v606 = vadd.f32 %v466, %v605
  %v607 = vpop.f32.mrb[0].mxu0
  %v608 = vadd.f32 %v462, %v607
  %v609 = vpop.f32.mrb[0].mxu0
  %v610 = vadd.f32 %v466, %v609
  %611 = vmatprep.mubr.bf16.mxu0 0
  %612 = vmatmul.mubr.bf16.gmra.mrb[0].mxu0 %v428
  %v613 = vpop.f32.mrb[0].mxu0
  %v614 = vadd.f32 %v462, %v613
  %v615 = vpop.f32.mrb[0].mxu0
  %v616 = vadd.f32 %v466, %v615
  %v617 = vpop.f32.mrb[0].mxu0
  %v618 = vadd.f32 %v462, %v617
  %v619 = vpop.f32.mrb[0].mxu0
  %v620 = vadd.f32 %v466, %v619
  %621 = vmatprep.mubr.bf16.mxu0 0
  %622 = vmatmul.mubr.bf16.gmra.mrb[0].mxu0 %v429
  %v623 = vpop.f32.mrb[0].mxu0
  %v624 = vadd.f32 %v462, %v623
  %v625 = vpop.f32.mrb[0].mxu0
  %v626 = vadd.f32 %v466, %v625
  %v627 = vpop.f32.mrb[0].mxu0
  %v628 = vadd.f32 %v462, %v627
  %v629 = vpop.f32.mrb[0].mxu0
  %v630 = vadd.f32 %v466, %v629
  %631 = vmatprep.mubr.bf16.mxu0 0
  %632 = vmatmul.mubr.bf16.gmra.mrb[0].mxu0 %v430
  %v633 = vpop.f32.mrb[0].mxu0
  %v634 = vadd.f32 %v462, %v633
  %v635 = vpop.f32.mrb[0].mxu0
  %v636 = vadd.f32 %v466, %v635
  %v637 = vpop.f32.mrb[0].mxu0
  %v638 = vadd.f32 %v462, %v637
  %v639 = vpop.f32.mrb[0].mxu0
  %v640 = vadd.f32 %v466, %v639
  %641 = vmatprep.mubr.bf16.mxu0 0
  %642 = vmatmul.mubr.bf16.gmra.mrb[0].mxu0 %v431
  %v643 = vpop.f32.mrb[0].mxu0
  %v644 = vadd.f32 %v462, %v643
  %v645 = vpop.f32.mrb[0].mxu0
  %v646 = vadd.f32 %v466, %v645
  %v647 = vpop.f32.mrb[0].mxu0
  %v648 = vadd.f32 %v462, %v647
  %v649 = vpop.f32.mrb[0].mxu0
  %v650 = vadd.f32 %v466, %v649
  %651 = vmatprep.mubr.bf16.mxu0 0
  %652 = vmatmul.mubr.bf16.gmra.mrb[0].mxu0 %v432
  %v653 = vpop.f32.mrb[0].mxu0
  %v654 = vadd.f32 %v462, %v653
  %v655 = vpop.f32.mrb[0].mxu0
  %v656 = vadd.f32 %v466, %v655
  %v657 = vpop.f32.mrb[0].mxu0
  %v658 = vadd.f32 %v462, %v657
  %v659 = vpop.f32.mrb[0].mxu0
  %v660 = vadd.f32 %v466, %v659
  %661 = vmatprep.mubr.bf16.mxu0 0
  %662 = vmatmul.mubr.bf16.gmra.mrb[0].mxu0 %v433
  %v663 = vpop.f32.mrb[0].mxu0
  %v664 = vadd.f32 %v462, %v663
  %v665 = vpop.f32.mrb[0].mxu0
  %v666 = vadd.f32 %v466, %v665
  %v667 = vpop.f32.mrb[0].mxu0
  %v668 = vadd.f32 %v462, %v667
  %v669 = vpop.f32.mrb[0].mxu0
  %v670 = vadd.f32 %v466, %v669
  %671 = vmatprep.mubr.bf16.mxu0 0
  %672 = vmatmul.mubr.bf16.gmra.mrb[0].mxu0 %v434
  %v673 = vpop.f32.mrb[0].mxu0
  %v674 = vadd.f32 %v462, %v673
  %v675 = vpop.f32.mrb[0].mxu0
  %v676 = vadd.f32 %v466, %v675
  %v677 = vpop.f32.mrb[0].mxu0
  %v678 = vadd.f32 %v462, %v677
  %v679 = vpop.f32.mrb[0].mxu0
  %v680 = vadd.f32 %v466, %v679
  %681 = vmatprep.mubr.bf16.mxu0 0
  %682 = vmatmul.mubr.bf16.gmra.mrb[0].mxu0 %v435
  %v683 = vpop.f32.mrb[0].mxu0
  %v684 = vadd.f32 %v462, %v683
  %v685 = vpop.f32.mrb[0].mxu0
  %v686 = vadd.f32 %v466, %v685
  %v687 = vpop.f32.mrb[0].mxu0
  %v688 = vadd.f32 %v462, %v687
  %v689 = vpop.f32.mrb[0].mxu0
  %v690 = vadd.f32 %v466, %v689
  %691 = vmatprep.mubr.bf16.mxu0 0
  %692 = vmatmul.mubr.bf16.gmra.mrb[0].mxu0 %v436
  %v693 = vpop.f32.mrb[0].mxu0
  %v694 = vadd.f32 %v462, %v693
  %v695 = vpop.f32.mrb[0].mxu0
  %v696 = vadd.f32 %v466, %v695
  %v697 = vpop.f32.mrb[0].mxu0
  %v698 = vadd.f32 %v462, %v697
  %v699 = vpop.f32.mrb[0].mxu0
  %v700 = vadd.f32 %v466, %v699
  %701 = vmatprep.mubr.bf16.mxu0 0
  %702 = vmatmul.mubr.bf16.gmra.mrb[0].mxu0 %v437
  %v703 = vpop.f32.mrb[0].mxu0
  %v704 = vadd.f32 %v462, %v703
  %v705 = vpop.f32.mrb[0].mxu0
  %v706 = vadd.f32 %v466, %v705
  %v707 = vpop.f32.mrb[0].mxu0
  %v708 = vadd.f32 %v462, %v707
  %v709 = vpop.f32.mrb[0].mxu0
  %v710 = vadd.f32 %v466, %v709
  %711 = vmatprep.mubr.bf16.mxu0 0
  %712 = vmatmul.mubr.bf16.gmra.mrb[0].mxu0 %v438
  %v713 = vpop.f32.mrb[0].mxu0
  %v714 = vadd.f32 %v462, %v713
  %v715 = vpop.f32.mrb[0].mxu0
  %v716 = vadd.f32 %v466, %v715
  %v717 = vpop.f32.mrb[0].mxu0
  %v718 = vadd.f32 %v462, %v717
  %v719 = vpop.f32.mrb[0].mxu0
  %v720 = vadd.f32 %v466, %v719
  %721 = vmatprep.mubr.bf16.mxu0 0
  %722 = vmatmul.mubr.bf16.gmra.mrb[0].mxu0 %v439
  %v723 = vpop.f32.mrb[0].mxu0
  %v724 = vadd.f32 %v462, %v723
  %v725 = vpop.f32.mrb[0].mxu0
  %v726 = vadd.f32 %v466, %v725
  %v727 = vpop.f32.mrb[0].mxu0
  %v728 = vadd.f32 %v462, %v727
  %v729 = vpop.f32.mrb[0].mxu0
  %v730 = vadd.f32 %v466, %v729
  %731 = vmatprep.mubr.bf16.mxu0 0
  %732 = vmatmul.mubr.bf16.gmra.mrb[0].mxu0 %v440
  %v733 = vpop.f32.mrb[0].mxu0
  %v734 = vadd.f32 %v462, %v733
  %v735 = vpop.f32.mrb[0].mxu0
  %v736 = vadd.f32 %v466, %v735
  %v737 = vpop.f32.mrb[0].mxu0
  %v738 = vadd.f32 %v462, %v737
  %v739 = vpop.f32.mrb[0].mxu0
  %v740 = vadd.f32 %v466, %v739
  %741 = vdwg.mxu0
  %v742 = vmax.f32 %v584, 0.0
  %v743 = vmax.f32 %v586, 0.0
  %v744 = vmax.f32 %v588, 0.0
  %v745 = vmax.f32 %v590, 0.0
  %v746 = vmax.f32 %v594, 0.0
  %v747 = vmax.f32 %v596, 0.0
  %v748 = vmax.f32 %v598, 0.0
  %v749 = vmax.f32 %v600, 0.0
  %v750 = vmax.f32 %v604, 0.0
  %v751 = vmax.f32 %v606, 0.0
  %v752 = vmax.f32 %v608, 0.0
  %v753 = vmax.f32 %v610, 0.0
  %v754 = vmax.f32 %v614, 0.0
  %v755 = vmax.f32 %v616, 0.0
  %v756 = vmax.f32 %v618, 0.0
  %v757 = vmax.f32 %v620, 0.0
  %v758 = vmax.f32 %v624, 0.0
  %v759 = vmax.f32 %v626, 0.0
  %v760 = vmax.f32 %v628, 0.0
  %v761 = vmax.f32 %v630, 0.0
  %v762 = vmax.f32 %v634, 0.0
  %v763 = vmax.f32 %v636, 0.0
  %v764 = vmax.f32 %v638, 0.0
  %v765 = vmax.f32 %v640, 0.0
  %v766 = vmax.f32 %v644, 0.0
  %v767 = vmax.f32 %v646, 0.0
  %v768 = vmax.f32 %v648, 0.0
  %v769 = vmax.f32 %v650, 0.0
  %v770 = vmax.f32 %v654, 0.0
  %v771 = vmax.f32 %v656, 0.0
  %v772 = vmax.f32 %v658, 0.0
  %v773 = vmax.f32 %v660, 0.0
  %v774 = vmax.f32 %v664, 0.0
  %v775 = vmax.f32 %v666, 0.0
  %v776 = vmax.f32 %v668, 0.0
  %v777 = vmax.f32 %v670, 0.0
  %v778 = vmax.f32 %v674, 0.0
  %v779 = vmax.f32 %v676, 0.0
  %v780 = vmax.f32 %v678, 0.0
  %v781 = vmax.f32 %v680, 0.0
  %v782 = vmax.f32 %v684, 0.0
  %v783 = vmax.f32 %v686, 0.0
  %v784 = vmax.f32 %v688, 0.0
  %v785 = vmax.f32 %v690, 0.0
  %v786 = vmax.f32 %v694, 0.0
  %v787 = vmax.f32 %v696, 0.0
  %v788 = vmax.f32 %v698, 0.0
  %v789 = vmax.f32 %v700, 0.0
  %v790 = vmax.f32 %v704, 0.0
  %v791 = vmax.f32 %v706, 0.0
  %v792 = vmax.f32 %v708, 0.0
  %v793 = vmax.f32 %v710, 0.0
  %v794 = vmax.f32 %v714, 0.0
  %v795 = vmax.f32 %v716, 0.0
  %v796 = vmax.f32 %v718, 0.0
  %v797 = vmax.f32 %v720, 0.0
  %v798 = vmax.f32 %v724, 0.0
  %v799 = vmax.f32 %v726, 0.0
  %v800 = vmax.f32 %v728, 0.0
  %v801 = vmax.f32 %v730, 0.0
  %v802 = vmax.f32 %v734, 0.0
  %v803 = vmax.f32 %v736, 0.0
  %v804 = vmax.f32 %v738, 0.0
  %v805 = vmax.f32 %v740, 0.0
  %v806 = vpack.c.bf16 %v744, %v742
  %v807 = vpack.c.bf16 %v745, %v743
  %v808 = vpack.c.bf16 %v748, %v746
  %v809 = vpack.c.bf16 %v749, %v747
  %v810 = vpack.c.bf16 %v752, %v750
  %v811 = vpack.c.bf16 %v753, %v751
  %v812 = vpack.c.bf16 %v756, %v754
  %v813 = vpack.c.bf16 %v757, %v755
  %v814 = vpack.c.bf16 %v760, %v758
  %v815 = vpack.c.bf16 %v761, %v759
  %v816 = vpack.c.bf16 %v764, %v762
  %v817 = vpack.c.bf16 %v765, %v763
  %v818 = vpack.c.bf16 %v768, %v766
  %v819 = vpack.c.bf16 %v769, %v767
  %v820 = vpack.c.bf16 %v772, %v770
  %v821 = vpack.c.bf16 %v773, %v771
  %v822 = vpack.c.bf16 %v776, %v774
  %v823 = vpack.c.bf16 %v777, %v775
  %v824 = vpack.c.bf16 %v780, %v778
  %v825 = vpack.c.bf16 %v781, %v779
  %v826 = vpack.c.bf16 %v784, %v782
  %v827 = vpack.c.bf16 %v785, %v783
  %v828 = vpack.c.bf16 %v788, %v786
  %v829 = vpack.c.bf16 %v789, %v787
  %v830 = vpack.c.bf16 %v792, %v790
  %v831 = vpack.c.bf16 %v793, %v791
  %v832 = vpack.c.bf16 %v796, %v794
  %v833 = vpack.c.bf16 %v797, %v795
  %v834 = vpack.c.bf16 %v800, %v798
  %v835 = vpack.c.bf16 %v801, %v799
  %v836 = vpack.c.bf16 %v804, %v802
  %v837 = vpack.c.bf16 %v805, %v803
  %v838 = vld [vmem:[%s5] sm:$0xf]
  %v839 = vld [vmem:[%s5 + $0x4] sm:$0xf]
  %v840 = vld [vmem:[%s5 + $0x8] sm:$0xf]
  %v841 = vld [vmem:[%s5 + $0xc] sm:$0xf]
  %v842 = vld [vmem:[%s5 + $0x10] sm:$0xf]
  %v843 = vld [vmem:[%s5 + $0x14] sm:$0xf]
  %v844 = vld [vmem:[%s5 + $0x18] sm:$0xf]
  %v845 = vld [vmem:[%s5 + $0x1c] sm:$0xf]
  %v846 = vld [vmem:[%s5 + $0x20] sm:$0xf]
  %v847 = vld [vmem:[%s5 + $0x24] sm:$0xf]
  %v848 = vld [vmem:[%s5 + $0x28] sm:$0xf]
  %v849 = vld [vmem:[%s5 + $0x2c] sm:$0xf]
  %v850 = vld [vmem:[%s5 + $0x30] sm:$0xf]
  %v851 = vld [vmem:[%s5 + $0x34] sm:$0xf]
  %v852 = vld [vmem:[%s5 + $0x38] sm:$0xf]
  %v853 = vld [vmem:[%s5 + $0x3c] sm:$0xf]
  %v854 = vld [vmem:[%s5 + $0x40] sm:$0xf]
  %v855 = vld [vmem:[%s5 + $0x44] sm:$0xf]
  %v856 = vld [vmem:[%s5 + $0x48] sm:$0xf]
  %v857 = vld [vmem:[%s5 + $0x4c] sm:$0xf]
  %v858 = vld [vmem:[%s5 + $0x50] sm:$0xf]
  %v859 = vld [vmem:[%s5 + $0x54] sm:$0xf]
  %v860 = vld [vmem:[%s5 + $0x58] sm:$0xf]
  %v861 = vld [vmem:[%s5 + $0x5c] sm:$0xf]
  %v862 = vld [vmem:[%s5 + $0x60] sm:$0xf]
  %v863 = vld [vmem:[%s5 + $0x64] sm:$0xf]
  %v864 = vld [vmem:[%s5 + $0x68] sm:$0xf]
  %v865 = vld [vmem:[%s5 + $0x6c] sm:$0xf]
  %v866 = vld [vmem:[%s5 + $0x70] sm:$0xf]
  %v867 = vld [vmem:[%s5 + $0x74] sm:$0xf]
  %v868 = vld [vmem:[%s5 + $0x78] sm:$0xf]
  %v869 = vld [vmem:[%s5 + $0x7c] sm:$0xf]
  %v870 = vld [vmem:[%s6] sm:$0x1]
  %v872 = vlaneseq
  %v873 = vshrl.u32 %v872, 7
  %v874 = vsub.s32 0, %v873
  %v875 = vrot.slane %v870, %v874
  %v909 = vunpack.c.l.b16 %v838
  %v910 = vunpack.c.l.b16 %v839
  %v911 = vunpack.c.l.b16 %v840
  %v912 = vunpack.c.l.b16 %v841
  %v913 = vunpack.c.l.b16 %v842
  %v914 = vunpack.c.l.b16 %v843
  %v915 = vunpack.c.l.b16 %v844
  %v916 = vunpack.c.l.b16 %v845
  %v917 = vunpack.c.l.b16 %v846
  %v918 = vunpack.c.l.b16 %v847
  %v919 = vunpack.c.l.b16 %v848
  %v920 = vunpack.c.l.b16 %v849
  %v921 = vunpack.c.l.b16 %v850
  %v922 = vunpack.c.l.b16 %v851
  %v923 = vunpack.c.l.b16 %v852
  %v924 = vunpack.c.l.b16 %v853
  %v925 = vunpack.c.l.b16 %v854
  %v926 = vunpack.c.l.b16 %v855
  %v927 = vunpack.c.l.b16 %v856
  %v928 = vunpack.c.l.b16 %v857
  %v929 = vunpack.c.l.b16 %v858
  %v930 = vunpack.c.l.b16 %v859
  %v931 = vunpack.c.l.b16 %v860
  %v932 = vunpack.c.l.b16 %v861
  %v933 = vunpack.c.l.b16 %v862
  %v934 = vunpack.c.l.b16 %v863
  %v935 = vunpack.c.l.b16 %v864
  %v936 = vunpack.c.l.b16 %v865
  %v937 = vunpack.c.l.b16 %v866
  %v938 = vunpack.c.l.b16 %v867
  %v939 = vunpack.c.l.b16 %v868
  %v940 = vunpack.c.l.b16 %v869
  %v941 = vpack.c.b16 %v910, %v909
  %v942 = vpack.c.b16 %v912, %v911
  %v943 = vpack.c.b16 %v914, %v913
  %v944 = vpack.c.b16 %v916, %v915
  %v945 = vpack.c.b16 %v918, %v917
  %v946 = vpack.c.b16 %v920, %v919
  %v947 = vpack.c.b16 %v922, %v921
  %v948 = vpack.c.b16 %v924, %v923
  %v949 = vpack.c.b16 %v926, %v925
  %v950 = vpack.c.b16 %v928, %v927
  %v951 = vpack.c.b16 %v930, %v929
  %v952 = vpack.c.b16 %v932, %v931
  %v953 = vpack.c.b16 %v934, %v933
  %v954 = vpack.c.b16 %v936, %v935
  %v955 = vpack.c.b16 %v938, %v937
  %v956 = vpack.c.b16 %v940, %v939
  %973 = vmatprep.subr.bf16.mxu0 0
  %974 = vmatpush1.bf16.msra.mxu0 %v941
  %975 = vmatprep.subr.bf16.mxu0 0
  %976 = vmatpush1.bf16.msra.mxu0 %v942
  %977 = vmatprep.subr.bf16.mxu0 0
  %978 = vmatpush1.bf16.msra.mxu0 %v943
  %979 = vmatprep.subr.bf16.mxu0 0
  %980 = vmatpush1.bf16.msra.mxu0 %v944
  %981 = vmatprep.subr.bf16.mxu0 0
  %982 = vmatpush1.bf16.msra.mxu0 %v945
  %983 = vmatprep.subr.bf16.mxu0 0
  %984 = vmatpush1.bf16.msra.mxu0 %v946
  %985 = vmatprep.subr.bf16.mxu0 0
  %986 = vmatpush1.bf16.msra.mxu0 %v947
  %987 = vmatprep.subr.bf16.mxu0 0
  %988 = vmatpush1.bf16.msra.mxu0 %v948
  %989 = vmatprep.subr.bf16.mxu0 0
  %990 = vmatpush1.bf16.msra.mxu0 %v949
  %991 = vmatprep.subr.bf16.mxu0 0
  %992 = vmatpush1.bf16.msra.mxu0 %v950
  %993 = vmatprep.subr.bf16.mxu0 0
  %994 = vmatpush1.bf16.msra.mxu0 %v951
  %995 = vmatprep.subr.bf16.mxu0 0
  %996 = vmatpush1.bf16.msra.mxu0 %v952
  %997 = vmatprep.subr.bf16.mxu0 0
  %998 = vmatpush1.bf16.msra.mxu0 %v953
  %999 = vmatprep.subr.bf16.mxu0 0
  %1000 = vmatpush1.bf16.msra.mxu0 %v954
  %1001 = vmatprep.subr.bf16.mxu0 0
  %1002 = vmatpush1.bf16.msra.mxu0 %v955
  %1003 = vmatprep.subr.bf16.mxu0 0
  %1004 = vmatpush1.bf16.msra.mxu0 %v956
  %1005 = vmatprep.mubr.bf16.mxu0 %v807
  %1006 = vmatmul.mubr.bf16.gmra.mrb[0].mxu0 %v806
  %v1007 = vpop.f32.mrb[0].mxu0
  %v1008 = vadd.f32 %v875, %v1007
  %v1009 = vpop.f32.mrb[0].mxu0
  %v1010 = vpop.f32.mrb[0].mxu0
  %v1011 = vadd.f32 %v875, %v1010
  %v1012 = vpop.f32.mrb[0].mxu0
  %1013 = vmatprep.mubr.bf16.mxu0 %v809
  %1014 = vmatmul.mubr.bf16.gmra.mrb[0].mxu0 %v808
  %v1015 = vpop.f32.mrb[0].mxu0
  %v1016 = vadd.f32 %v875, %v1015
  %v1017 = vpop.f32.mrb[0].mxu0
  %v1018 = vpop.f32.mrb[0].mxu0
  %v1019 = vadd.f32 %v875, %v1018
  %v1020 = vpop.f32.mrb[0].mxu0
  %1021 = vmatprep.mubr.bf16.mxu0 %v811
  %1022 = vmatmul.mubr.bf16.gmra.mrb[0].mxu0 %v810
  %v1023 = vpop.f32.mrb[0].mxu0
  %v1024 = vadd.f32 %v875, %v1023
  %v1025 = vpop.f32.mrb[0].mxu0
  %v1026 = vpop.f32.mrb[0].mxu0
  %v1027 = vadd.f32 %v875, %v1026
  %v1028 = vpop.f32.mrb[0].mxu0
  %1029 = vmatprep.mubr.bf16.mxu0 %v813
  %1030 = vmatmul.mubr.bf16.gmra.mrb[0].mxu0 %v812
  %v1031 = vpop.f32.mrb[0].mxu0
  %v1032 = vadd.f32 %v875, %v1031
  %v1033 = vpop.f32.mrb[0].mxu0
  %v1034 = vpop.f32.mrb[0].mxu0
  %v1035 = vadd.f32 %v875, %v1034
  %v1036 = vpop.f32.mrb[0].mxu0
  %1037 = vmatprep.mubr.bf16.mxu0 %v815
  %1038 = vmatmul.mubr.bf16.gmra.mrb[0].mxu0 %v814
  %v1039 = vpop.f32.mrb[0].mxu0
  %v1040 = vadd.f32 %v875, %v1039
  %v1041 = vpop.f32.mrb[0].mxu0
  %v1042 = vpop.f32.mrb[0].mxu0
  %v1043 = vadd.f32 %v875, %v1042
  %v1044 = vpop.f32.mrb[0].mxu0
  %1045 = vmatprep.mubr.bf16.mxu0 %v817
  %1046 = vmatmul.mubr.bf16.gmra.mrb[0].mxu0 %v816
  %v1047 = vpop.f32.mrb[0].mxu0
  %v1048 = vadd.f32 %v875, %v1047
  %v1049 = vpop.f32.mrb[0].mxu0
  %v1050 = vpop.f32.mrb[0].mxu0
  %v1051 = vadd.f32 %v875, %v1050
  %v1052 = vpop.f32.mrb[0].mxu0
  %1053 = vmatprep.mubr.bf16.mxu0 %v819
  %1054 = vmatmul.mubr.bf16.gmra.mrb[0].mxu0 %v818
  %v1055 = vpop.f32.mrb[0].mxu0
  %v1056 = vadd.f32 %v875, %v1055
  %v1057 = vpop.f32.mrb[0].mxu0
  %v1058 = vpop.f32.mrb[0].mxu0
  %v1059 = vadd.f32 %v875, %v1058
  %v1060 = vpop.f32.mrb[0].mxu0
  %1061 = vmatprep.mubr.bf16.mxu0 %v821
  %1062 = vmatmul.mubr.bf16.gmra.mrb[0].mxu0 %v820
  %v1063 = vpop.f32.mrb[0].mxu0
  %v1064 = vadd.f32 %v875, %v1063
  %v1065 = vpop.f32.mrb[0].mxu0
  %v1066 = vpop.f32.mrb[0].mxu0
  %v1067 = vadd.f32 %v875, %v1066
  %v1068 = vpop.f32.mrb[0].mxu0
  %1069 = vmatprep.mubr.bf16.mxu0 %v823
  %1070 = vmatmul.mubr.bf16.gmra.mrb[0].mxu0 %v822
  %v1071 = vpop.f32.mrb[0].mxu0
  %v1072 = vadd.f32 %v875, %v1071
  %v1073 = vpop.f32.mrb[0].mxu0
  %v1074 = vpop.f32.mrb[0].mxu0
  %v1075 = vadd.f32 %v875, %v1074
  %v1076 = vpop.f32.mrb[0].mxu0
  %1077 = vmatprep.mubr.bf16.mxu0 %v825
  %1078 = vmatmul.mubr.bf16.gmra.mrb[0].mxu0 %v824
  %v1079 = vpop.f32.mrb[0].mxu0
  %v1080 = vadd.f32 %v875, %v1079
  %v1081 = vpop.f32.mrb[0].mxu0
  %v1082 = vpop.f32.mrb[0].mxu0
  %v1083 = vadd.f32 %v875, %v1082
  %v1084 = vpop.f32.mrb[0].mxu0
  %1085 = vmatprep.mubr.bf16.mxu0 %v827
  %1086 = vmatmul.mubr.bf16.gmra.mrb[0].mxu0 %v826
  %v1087 = vpop.f32.mrb[0].mxu0
  %v1088 = vadd.f32 %v875, %v1087
  %v1089 = vpop.f32.mrb[0].mxu0
  %v1090 = vpop.f32.mrb[0].mxu0
  %v1091 = vadd.f32 %v875, %v1090
  %v1092 = vpop.f32.mrb[0].mxu0
  %1093 = vmatprep.mubr.bf16.mxu0 %v829
  %1094 = vmatmul.mubr.bf16.gmra.mrb[0].mxu0 %v828
  %v1095 = vpop.f32.mrb[0].mxu0
  %v1096 = vadd.f32 %v875, %v1095
  %v1097 = vpop.f32.mrb[0].mxu0
  %v1098 = vpop.f32.mrb[0].mxu0
  %v1099 = vadd.f32 %v875, %v1098
  %v1100 = vpop.f32.mrb[0].mxu0
  %1101 = vmatprep.mubr.bf16.mxu0 %v831
  %1102 = vmatmul.mubr.bf16.gmra.mrb[0].mxu0 %v830
  %v1103 = vpop.f32.mrb[0].mxu0
  %v1104 = vadd.f32 %v875, %v1103
  %v1105 = vpop.f32.mrb[0].mxu0
  %v1106 = vpop.f32.mrb[0].mxu0
  %v1107 = vadd.f32 %v875, %v1106
  %v1108 = vpop.f32.mrb[0].mxu0
  %1109 = vmatprep.mubr.bf16.mxu0 %v833
  %1110 = vmatmul.mubr.bf16.gmra.mrb[0].mxu0 %v832
  %v1111 = vpop.f32.mrb[0].mxu0
  %v1112 = vadd.f32 %v875, %v1111
  %v1113 = vpop.f32.mrb[0].mxu0
  %v1114 = vpop.f32.mrb[0].mxu0
  %v1115 = vadd.f32 %v875, %v1114
  %v1116 = vpop.f32.mrb[0].mxu0
  %1117 = vmatprep.mubr.bf16.mxu0 %v835
  %1118 = vmatmul.mubr.bf16.gmra.mrb[0].mxu0 %v834
  %v1119 = vpop.f32.mrb[0].mxu0
  %v1120 = vadd.f32 %v875, %v1119
  %v1121 = vpop.f32.mrb[0].mxu0
  %v1122 = vpop.f32.mrb[0].mxu0
  %v1123 = vadd.f32 %v875, %v1122
  %v1124 = vpop.f32.mrb[0].mxu0
  %1125 = vmatprep.mubr.bf16.mxu0 %v837
  %1126 = vmatmul.mubr.bf16.gmra.mrb[0].mxu0 %v836
  %v1127 = vpop.f32.mrb[0].mxu0
  %v1128 = vadd.f32 %v875, %v1127
  %v1129 = vpop.f32.mrb[0].mxu0
  %v1130 = vpop.f32.mrb[0].mxu0
  %v1131 = vadd.f32 %v875, %v1130
  %v1132 = vpop.f32.mrb[0].mxu0
  %1133 = vdwg.mxu0
  %v1134 = vmax.f32 %v1008, 0.0
  %v1135 = vmax.f32 %v1011, 0.0
  %v1136 = vmax.f32 %v1016, 0.0
  %v1137 = vmax.f32 %v1019, 0.0
  %v1138 = vmax.f32 %v1024, 0.0
  %v1139 = vmax.f32 %v1027, 0.0
  %v1140 = vmax.f32 %v1032, 0.0
  %v1141 = vmax.f32 %v1035, 0.0
  %v1142 = vmax.f32 %v1040, 0.0
  %v1143 = vmax.f32 %v1043, 0.0
  %v1144 = vmax.f32 %v1048, 0.0
  %v1145 = vmax.f32 %v1051, 0.0
  %v1146 = vmax.f32 %v1056, 0.0
  %v1147 = vmax.f32 %v1059, 0.0
  %v1148 = vmax.f32 %v1064, 0.0
  %v1149 = vmax.f32 %v1067, 0.0
  %v1150 = vmax.f32 %v1072, 0.0
  %v1151 = vmax.f32 %v1075, 0.0
  %v1152 = vmax.f32 %v1080, 0.0
  %v1153 = vmax.f32 %v1083, 0.0
  %v1154 = vmax.f32 %v1088, 0.0
  %v1155 = vmax.f32 %v1091, 0.0
  %v1156 = vmax.f32 %v1096, 0.0
  %v1157 = vmax.f32 %v1099, 0.0
  %v1158 = vmax.f32 %v1104, 0.0
  %v1159 = vmax.f32 %v1107, 0.0
  %v1160 = vmax.f32 %v1112, 0.0
  %v1161 = vmax.f32 %v1115, 0.0
  %v1162 = vmax.f32 %v1120, 0.0
  %v1163 = vmax.f32 %v1123, 0.0
  %v1164 = vmax.f32 %v1128, 0.0
  %v1165 = vmax.f32 %v1131, 0.0
  %v1166 = vpack.c.bf16 %v1135, %v1134
  %v1167 = vpack.c.bf16 %v1137, %v1136
  %v1168 = vpack.c.bf16 %v1139, %v1138
  %v1169 = vpack.c.bf16 %v1141, %v1140
  %v1170 = vpack.c.bf16 %v1143, %v1142
  %v1171 = vpack.c.bf16 %v1145, %v1144
  %v1172 = vpack.c.bf16 %v1147, %v1146
  %v1173 = vpack.c.bf16 %v1149, %v1148
  %v1174 = vpack.c.bf16 %v1151, %v1150
  %v1175 = vpack.c.bf16 %v1153, %v1152
  %v1176 = vpack.c.bf16 %v1155, %v1154
  %v1177 = vpack.c.bf16 %v1157, %v1156
  %v1178 = vpack.c.bf16 %v1159, %v1158
  %v1179 = vpack.c.bf16 %v1161, %v1160
  %v1180 = vpack.c.bf16 %v1163, %v1162
  %v1181 = vpack.c.bf16 %v1165, %v1164
  %v1182 = vld [vmem:[%s7] sm:$0xf]
  %v1183 = vld [vmem:[%s7 + $0x4] sm:$0xf]
  %v1184 = vld [vmem:[%s7 + $0x8] sm:$0xf]
  %v1185 = vld [vmem:[%s7 + $0xc] sm:$0xf]
  %v1186 = vld [vmem:[%s7 + $0x10] sm:$0xf]
  %v1187 = vld [vmem:[%s7 + $0x14] sm:$0xf]
  %v1188 = vld [vmem:[%s7 + $0x18] sm:$0xf]
  %v1189 = vld [vmem:[%s7 + $0x1c] sm:$0xf]
  %v1190 = vld [vmem:[%s7 + $0x20] sm:$0xf]
  %v1191 = vld [vmem:[%s7 + $0x24] sm:$0xf]
  %v1192 = vld [vmem:[%s7 + $0x28] sm:$0xf]
  %v1193 = vld [vmem:[%s7 + $0x2c] sm:$0xf]
  %v1194 = vld [vmem:[%s7 + $0x30] sm:$0xf]
  %v1195 = vld [vmem:[%s7 + $0x34] sm:$0xf]
  %v1196 = vld [vmem:[%s7 + $0x38] sm:$0xf]
  %v1197 = vld [vmem:[%s7 + $0x3c] sm:$0xf]
  %v1198 = vld [vmem:[%s8] sm:$0x1]
  %v1200 = vlaneseq
  %v1201 = vshrl.u32 %v1200, 7
  %v1202 = vsub.s32 0, %v1201
  %v1203 = vrot.slane %v1198, %v1202
  %v1221 = vunpack.c.l.b16 %v1182
  %v1222 = vunpack.c.l.b16 %v1183
  %v1223 = vunpack.c.l.b16 %v1184
  %v1224 = vunpack.c.l.b16 %v1185
  %v1225 = vunpack.c.l.b16 %v1186
  %v1226 = vunpack.c.l.b16 %v1187
  %v1227 = vunpack.c.l.b16 %v1188
  %v1228 = vunpack.c.l.b16 %v1189
  %v1229 = vunpack.c.l.b16 %v1190
  %v1230 = vunpack.c.l.b16 %v1191
  %v1231 = vunpack.c.l.b16 %v1192
  %v1232 = vunpack.c.l.b16 %v1193
  %v1233 = vunpack.c.l.b16 %v1194
  %v1234 = vunpack.c.l.b16 %v1195
  %v1235 = vunpack.c.l.b16 %v1196
  %v1236 = vunpack.c.l.b16 %v1197
  %v1237 = vpack.c.b16 %v1222, %v1221
  %v1238 = vpack.c.b16 %v1224, %v1223
  %v1239 = vpack.c.b16 %v1226, %v1225
  %v1240 = vpack.c.b16 %v1228, %v1227
  %v1241 = vpack.c.b16 %v1230, %v1229
  %v1242 = vpack.c.b16 %v1232, %v1231
  %v1243 = vpack.c.b16 %v1234, %v1233
  %v1244 = vpack.c.b16 %v1236, %v1235
  %1253 = vmatprep.subr.bf16.mxu0 0
  %1254 = vmatpush1.bf16.msra.mxu0 %v1237
  %1255 = vmatprep.subr.bf16.mxu0 0
  %1256 = vmatpush1.bf16.msra.mxu0 %v1238
  %1257 = vmatprep.subr.bf16.mxu0 0
  %1258 = vmatpush1.bf16.msra.mxu0 %v1239
  %1259 = vmatprep.subr.bf16.mxu0 0
  %1260 = vmatpush1.bf16.msra.mxu0 %v1240
  %1261 = vmatprep.subr.bf16.mxu0 0
  %1262 = vmatpush1.bf16.msra.mxu0 %v1241
  %1263 = vmatprep.subr.bf16.mxu0 0
  %1264 = vmatpush1.bf16.msra.mxu0 %v1242
  %1265 = vmatprep.subr.bf16.mxu0 0
  %1266 = vmatpush1.bf16.msra.mxu0 %v1243
  %1267 = vmatprep.subr.bf16.mxu0 0
  %1268 = vmatpush1.bf16.msra.mxu0 %v1244
  %1269 = vmatprep.subr.bf16.mxu0 0
  %1270 = vmatpush1.bf16.msra.mxu0 0
  %1271 = vmatprep.subr.bf16.mxu0 0
  %1272 = vmatpush1.bf16.msra.mxu0 0
  %1273 = vmatprep.subr.bf16.mxu0 0
  %1274 = vmatpush1.bf16.msra.mxu0 0
  %1275 = vmatprep.subr.bf16.mxu0 0
  %1276 = vmatpush1.bf16.msra.mxu0 0
  %1277 = vmatprep.subr.bf16.mxu0 0
  %1278 = vmatpush1.bf16.msra.mxu0 0
  %1279 = vmatprep.subr.bf16.mxu0 0
  %1280 = vmatpush1.bf16.msra.mxu0 0
  %1281 = vmatprep.subr.bf16.mxu0 0
  %1282 = vmatpush1.bf16.msra.mxu0 0
  %1283 = vmatprep.subr.bf16.mxu0 0
  %1284 = vmatpush1.bf16.msra.mxu0 0
  %1285 = vmatprep.mubr.bf16.mxu0 0
  %1286 = vmatmul.mubr.bf16.gmra.mrb[0].mxu0 %v1166
  %v1287 = vpop.f32.mrb[0].mxu0
  %v1288 = vadd.f32 %v1203, %v1287
  %v1289 = vpop.f32.mrb[0].mxu0
  %v1290 = vpop.f32.mrb[0].mxu0
  %v1291 = vadd.f32 %v1203, %v1290
  %v1292 = vpop.f32.mrb[0].mxu0
  %1293 = vmatprep.mubr.bf16.mxu0 0
  %1294 = vmatmul.mubr.bf16.gmra.mrb[0].mxu0 %v1167
  %v1295 = vpop.f32.mrb[0].mxu0
  %v1296 = vadd.f32 %v1203, %v1295
  %v1297 = vpop.f32.mrb[0].mxu0
  %v1298 = vpop.f32.mrb[0].mxu0
  %v1299 = vadd.f32 %v1203, %v1298
  %v1300 = vpop.f32.mrb[0].mxu0
  %1301 = vmatprep.mubr.bf16.mxu0 0
  %1302 = vmatmul.mubr.bf16.gmra.mrb[0].mxu0 %v1168
  %v1303 = vpop.f32.mrb[0].mxu0
  %v1304 = vadd.f32 %v1203, %v1303
  %v1305 = vpop.f32.mrb[0].mxu0
  %v1306 = vpop.f32.mrb[0].mxu0
  %v1307 = vadd.f32 %v1203, %v1306
  %v1308 = vpop.f32.mrb[0].mxu0
  %1309 = vmatprep.mubr.bf16.mxu0 0
  %1310 = vmatmul.mubr.bf16.gmra.mrb[0].mxu0 %v1169
  %v1311 = vpop.f32.mrb[0].mxu0
  %v1312 = vadd.f32 %v1203, %v1311
  %v1313 = vpop.f32.mrb[0].mxu0
  %v1314 = vpop.f32.mrb[0].mxu0
  %v1315 = vadd.f32 %v1203, %v1314
  %v1316 = vpop.f32.mrb[0].mxu0
  %1317 = vmatprep.mubr.bf16.mxu0 0
  %1318 = vmatmul.mubr.bf16.gmra.mrb[0].mxu0 %v1170
  %v1319 = vpop.f32.mrb[0].mxu0
  %v1320 = vadd.f32 %v1203, %v1319
  %v1321 = vpop.f32.mrb[0].mxu0
  %v1322 = vpop.f32.mrb[0].mxu0
  %v1323 = vadd.f32 %v1203, %v1322
  %v1324 = vpop.f32.mrb[0].mxu0
  %1325 = vmatprep.mubr.bf16.mxu0 0
  %1326 = vmatmul.mubr.bf16.gmra.mrb[0].mxu0 %v1171
  %v1327 = vpop.f32.mrb[0].mxu0
  %v1328 = vadd.f32 %v1203, %v1327
  %v1329 = vpop.f32.mrb[0].mxu0
  %v1330 = vpop.f32.mrb[0].mxu0
  %v1331 = vadd.f32 %v1203, %v1330
  %v1332 = vpop.f32.mrb[0].mxu0
  %1333 = vmatprep.mubr.bf16.mxu0 0
  %1334 = vmatmul.mubr.bf16.gmra.mrb[0].mxu0 %v1172
  %v1335 = vpop.f32.mrb[0].mxu0
  %v1336 = vadd.f32 %v1203, %v1335
  %v1337 = vpop.f32.mrb[0].mxu0
  %v1338 = vpop.f32.mrb[0].mxu0
  %v1339 = vadd.f32 %v1203, %v1338
  %v1340 = vpop.f32.mrb[0].mxu0
  %1341 = vmatprep.mubr.bf16.mxu0 0
  %1342 = vmatmul.mubr.bf16.gmra.mrb[0].mxu0 %v1173
  %v1343 = vpop.f32.mrb[0].mxu0
  %v1344 = vadd.f32 %v1203, %v1343
  %v1345 = vpop.f32.mrb[0].mxu0
  %v1346 = vpop.f32.mrb[0].mxu0
  %v1347 = vadd.f32 %v1203, %v1346
  %v1348 = vpop.f32.mrb[0].mxu0
  %1349 = vmatprep.mubr.bf16.mxu0 0
  %1350 = vmatmul.mubr.bf16.gmra.mrb[0].mxu0 %v1174
  %v1351 = vpop.f32.mrb[0].mxu0
  %v1352 = vadd.f32 %v1203, %v1351
  %v1353 = vpop.f32.mrb[0].mxu0
  %v1354 = vpop.f32.mrb[0].mxu0
  %v1355 = vadd.f32 %v1203, %v1354
  %v1356 = vpop.f32.mrb[0].mxu0
  %1357 = vmatprep.mubr.bf16.mxu0 0
  %1358 = vmatmul.mubr.bf16.gmra.mrb[0].mxu0 %v1175
  %v1359 = vpop.f32.mrb[0].mxu0
  %v1360 = vadd.f32 %v1203, %v1359
  %v1361 = vpop.f32.mrb[0].mxu0
  %v1362 = vpop.f32.mrb[0].mxu0
  %v1363 = vadd.f32 %v1203, %v1362
  %v1364 = vpop.f32.mrb[0].mxu0
  %1365 = vmatprep.mubr.bf16.mxu0 0
  %1366 = vmatmul.mubr.bf16.gmra.mrb[0].mxu0 %v1176
  %v1367 = vpop.f32.mrb[0].mxu0
  %v1368 = vadd.f32 %v1203, %v1367
  %v1369 = vpop.f32.mrb[0].mxu0
  %v1370 = vpop.f32.mrb[0].mxu0
  %v1371 = vadd.f32 %v1203, %v1370
  %v1372 = vpop.f32.mrb[0].mxu0
  %1373 = vmatprep.mubr.bf16.mxu0 0
  %1374 = vmatmul.mubr.bf16.gmra.mrb[0].mxu0 %v1177
  %v1375 = vpop.f32.mrb[0].mxu0
  %v1376 = vadd.f32 %v1203, %v1375
  %v1377 = vpop.f32.mrb[0].mxu0
  %v1378 = vpop.f32.mrb[0].mxu0
  %v1379 = vadd.f32 %v1203, %v1378
  %v1380 = vpop.f32.mrb[0].mxu0
  %1381 = vmatprep.mubr.bf16.mxu0 0
  %1382 = vmatmul.mubr.bf16.gmra.mrb[0].mxu0 %v1178
  %v1383 = vpop.f32.mrb[0].mxu0
  %v1384 = vadd.f32 %v1203, %v1383
  %v1385 = vpop.f32.mrb[0].mxu0
  %v1386 = vpop.f32.mrb[0].mxu0
  %v1387 = vadd.f32 %v1203, %v1386
  %v1388 = vpop.f32.mrb[0].mxu0
  %1389 = vmatprep.mubr.bf16.mxu0 0
  %1390 = vmatmul.mubr.bf16.gmra.mrb[0].mxu0 %v1179
  %v1391 = vpop.f32.mrb[0].mxu0
  %v1392 = vadd.f32 %v1203, %v1391
  %v1393 = vpop.f32.mrb[0].mxu0
  %v1394 = vpop.f32.mrb[0].mxu0
  %v1395 = vadd.f32 %v1203, %v1394
  %v1396 = vpop.f32.mrb[0].mxu0
  %1397 = vmatprep.mubr.bf16.mxu0 0
  %1398 = vmatmul.mubr.bf16.gmra.mrb[0].mxu0 %v1180
  %v1399 = vpop.f32.mrb[0].mxu0
  %v1400 = vadd.f32 %v1203, %v1399
  %v1401 = vpop.f32.mrb[0].mxu0
  %v1402 = vpop.f32.mrb[0].mxu0
  %v1403 = vadd.f32 %v1203, %v1402
  %v1404 = vpop.f32.mrb[0].mxu0
  %1405 = vmatprep.mubr.bf16.mxu0 0
  %1406 = vmatmul.mubr.bf16.gmra.mrb[0].mxu0 %v1181
  %v1407 = vpop.f32.mrb[0].mxu0
  %v1408 = vadd.f32 %v1203, %v1407
  %v1409 = vpop.f32.mrb[0].mxu0
  %v1410 = vpop.f32.mrb[0].mxu0
  %v1411 = vadd.f32 %v1203, %v1410
  %v1412 = vpop.f32.mrb[0].mxu0
  %1413 = vdwg.mxu0
  %1414 = vst [vmem:[%s9] sm:$0xff] %v1288
  %1415 = vst [vmem:[%s9 + $0x8] sm:$0xff] %v1291
  %1416 = vst [vmem:[%s9 + $0x10] sm:$0xff] %v1296
  %1417 = vst [vmem:[%s9 + $0x18] sm:$0xff] %v1299
  %1418 = vst [vmem:[%s9 + $0x20] sm:$0xff] %v1304
  %1419 = vst [vmem:[%s9 + $0x28] sm:$0xff] %v1307
  %1420 = vst [vmem:[%s9 + $0x30] sm:$0xff] %v1312
  %1421 = vst [vmem:[%s9 + $0x38] sm:$0xff] %v1315
  %1422 = vst [vmem:[%s9 + $0x40] sm:$0xff] %v1320
  %1423 = vst [vmem:[%s9 + $0x48] sm:$0xff] %v1323
  %1424 = vst [vmem:[%s9 + $0x50] sm:$0xff] %v1328
  %1425 = vst [vmem:[%s9 + $0x58] sm:$0xff] %v1331
  %1426 = vst [vmem:[%s9 + $0x60] sm:$0xff] %v1336
  %1427 = vst [vmem:[%s9 + $0x68] sm:$0xff] %v1339
  %1428 = vst [vmem:[%s9 + $0x70] sm:$0xff] %v1344
  %1429 = vst [vmem:[%s9 + $0x78] sm:$0xff] %v1347
  %1430 = vst [vmem:[%s9 + $0x80] sm:$0xff] %v1352
  %1431 = vst [vmem:[%s9 + $0x88] sm:$0xff] %v1355
  %1432 = vst [vmem:[%s9 + $0x90] sm:$0xff] %v1360
  %1433 = vst [vmem:[%s9 + $0x98] sm:$0xff] %v1363
  %1434 = vst [vmem:[%s9 + $0xa0] sm:$0xff] %v1368
  %1435 = vst [vmem:[%s9 + $0xa8] sm:$0xff] %v1371
  %1436 = vst [vmem:[%s9 + $0xb0] sm:$0xff] %v1376
  %1437 = vst [vmem:[%s9 + $0xb8] sm:$0xff] %v1379
  %1438 = vst [vmem:[%s9 + $0xc0] sm:$0xff] %v1384
  %1439 = vst [vmem:[%s9 + $0xc8] sm:$0xff] %v1387
  %1440 = vst [vmem:[%s9 + $0xd0] sm:$0xff] %v1392
  %1441 = vst [vmem:[%s9 + $0xd8] sm:$0xff] %v1395
  %1442 = vst [vmem:[%s9 + $0xe0] sm:$0xff] %v1400
  %1443 = vst [vmem:[%s9 + $0xe8] sm:$0xff] %v1403
  %1444 = vst [vmem:[%s9 + $0xf0] sm:$0xff] %v1408
  %1445 = vst [vmem:[%s9 + $0xf8] sm:$0xff] %v1411
  // Predicated region
  $region38: #{mlp_forward.1} parent=0 // pred_check
    _
  $region39: #{mlp_forward.1} parent=0 // pred_check_branch
    %1447 = sbr.rel (0) target = $region41
  $region40: #{mlp_forward.1} parent=0 // pred_region
    _
  $region41: #{mlp_forward.1} parent=0 // pred_fallthru
    _
  // Predicated region
  $region42: #{mlp_forward.1} parent=0 // pred_check
    _
  $region43: #{mlp_forward.1} parent=0 // pred_check_branch
    %1449 = sbr.rel (0) target = $region45
  $region44: #{mlp_forward.1} parent=0 // pred_region
    _
  $region45: #{mlp_forward.1} parent=0 // pred_fallthru
    _

</llo_original>
